<compile_context>
chip_gen: v6e
topology: v6e:2x2x1
jax: 0.10.0
libtpu: 0.0.40
codegen_flags: <defaults>
</compile_context>

<pallas_src>
import functools
from collections import namedtuple

import jax
import jax.numpy as jnp
from jax.experimental import pallas as pl
from jax.experimental.pallas import tpu as pltpu

Genotype = namedtuple("Genotype", ["recurrent", "concat"])

# Standard DARTS recurrent genotype (Liu et al. 2019) -- 8 steps, concat 1..8.
DARTS_GENOTYPE = Genotype(
    recurrent=[("sigmoid", 0), ("relu", 1), ("relu", 1), ("identity", 1),
               ("tanh", 2), ("sigmoid", 5), ("tanh", 3), ("relu", 5)],
    concat=tuple(range(1, 9)),
)

_ACT = {
    "tanh": jnp.tanh,
    "relu": lambda v: jnp.maximum(v, 0.0),
    "sigmoid": jax.nn.sigmoid,
    "identity": lambda v: v,
}


def _round_up(v, m):
    return (v + m - 1) // m * m


def _vmem_limit_bytes():
    """Generation-aware VMEM budget, leaving headroom for Mosaic scratch."""
    try:
        cap = int(pltpu.get_tpu_info().vmem_capacity_bytes)
        return max(32 * 1024 * 1024, min(cap - 16 * 1024 * 1024, 100 * 1024 * 1024))
    except Exception:
        return 48 * 1024 * 1024     # safe on v5e/v6e (128 MiB) and v7x (64 MiB)


def _num_tensorcores():
    """Best-effort TensorCores-per-chip (v7x has 2; v5e/v6e have 1)."""
    try:
        kind = (getattr(jax.devices()[0], "device_kind", "") or "").lower()
        if "v7" in kind:
            return 2
    except Exception:
        pass
    return 1


def _pick_time_chunk(seq_len, bb, nhid_p, steps, out_bytes, vmem_limit, cap=16):
    """Largest in-kernel time unroll (<= cap) that fits the VMEM budget."""
    two_n = 2 * nhid_p
    fixed = 2 * (nhid_p * two_n + nhid_p * steps * two_n)       # bf16 weights, 1 buffer
    fixed += 2 * bb * nhid_p * 4 + bb * nhid_p * 4              # h0 (2 bufs) + h scratch
    per_t = 2 * (bb * two_n * 2) + 2 * (bb * nhid_p * out_bytes)  # xproj + out, 2 bufs
    budget = int(vmem_limit * 0.75) - fixed
    return max(1, min(cap, seq_len, budget // max(per_t, 1)))


def _group_schedule(genotype):
    """Group DAG nodes sharing a predecessor (one wide MXU dot per group),
    topologically ordered so each group's predecessor state is ready."""
    groups = {}
    for i, (_, p) in enumerate(genotype.recurrent):
        groups.setdefault(p, []).append(i)        # i = 0-based step index (node i+1)
    available = {0}
    remaining = dict(groups)
    schedule = []
    while remaining:
        progressed = False
        for p in list(remaining.keys()):
            if p in available:
                members = remaining.pop(p)
                schedule.append((p, tuple(members)))
                available.update(m + 1 for m in members)
                progressed = True
        if not progressed:
            raise ValueError("genotype predecessor graph is not schedulable")
    return tuple(schedule)


def _weight_spec(block_shape, index_map, single_buffer):
    """BlockSpec for a grid-invariant operand; one VMEM copy when requested."""
    if single_buffer:
        return pl.BlockSpec(block_shape, index_map,
                            pipeline_mode=pl.Buffered(buffer_count=1))
    return pl.BlockSpec(block_shape, index_map)


def _call_with_weight_buffering(call_fn):
    """call_fn(single_buffer) -> result.  Falls back to default double
    buffering if single-buffered BlockSpecs are unsupported on this jax."""
    try:
        return call_fn(True)
    except Exception:
        return call_fn(False)


# ---------------------------------------------------------------------------
# Kernel 1: hoisted input projection  x(all timesteps) @ W0[x-rows]  (parallel)
# ---------------------------------------------------------------------------
def _xproj_kernel(x_ref, w_ref, o_ref):
    o_ref[...] = jnp.dot(x_ref[...], w_ref[...],
                         preferred_element_type=jnp.float32).astype(o_ref.dtype)


# ---------------------------------------------------------------------------
# Kernel 2: the serial DARTS-cell recurrence.
# Grid = (batch_blocks "parallel", time_chunks "arbitrary").
#   xproj_ref : (t_chunk, bb, 2*nhid_p)    bf16  precomputed x-projection
#   h0_ref    : (bb, nhid_p)               f32   initial hidden state (per block)
#   w0h_ref   : (nhid_p, 2*nhid_p)         bf16  recurrent half of W0 (fused c|h)
#   ws_ref    : (nhid_p, steps*2*nhid_p)   bf16  per-DAG-step weights, grouped by
#                                                shared predecessor (fused c|h)
#   out_ref   : (t_chunk, bb, nhid_p)      f32/bf16 outputs (lane-dense)
#   h_scr     : (bb, nhid_p)               f32   hidden state carried across chunks
# ---------------------------------------------------------------------------
def _darts_recurrent_kernel(xproj_ref, h0_ref, w0h_ref, ws_ref, out_ref, h_scr,
                            *, genotype, schedule, col_off, nhid_pad, t_chunk):
    @pl.when(pl.program_id(1) == 0)              # new batch block -> reload h0
    def _():
        h_scr[...] = h0_ref[...]

    two_n = 2 * nhid_pad
    concat = set(genotype.concat)
    needed = {p for _, p in genotype.recurrent}  # states referenced as predecessors
    inv_n = 1.0 / len(genotype.concat)

    def _sigmoid(v):                              # EUP exp + approx reciprocal
        return pl.reciprocal(1.0 + jnp.exp(-v), approx=True)

    def _act(name, v):
        if name == "tanh":
            return jnp.tanh(v)
        if name == "relu":
            return jnp.maximum(v, 0.0)
        if name == "sigmoid":
            return _sigmoid(v)
        return v                                  # identity

    h = h_scr[...]                                # f32 carried state
    for t in range(t_chunk):                      # static unroll over the chunk
        xp = xproj_ref[t].astype(jnp.float32)     # (bb, 2*nhid_p)
        # s0 = h + sigmoid(c0) * (tanh(h0) - h),  [c0|h0] = x@W0x + h@W0h
        ch0 = xp + jnp.dot(h.astype(jnp.bfloat16), w0h_ref[...],
                           preferred_element_type=jnp.float32)
        c0 = _sigmoid(ch0[:, :nhid_pad])          # 128-aligned lane split
        h0 = jnp.tanh(ch0[:, nhid_pad:])
        s0 = h + c0 * (h0 - h)

        states = {0: s0}
        acc = s0 if 0 in concat else None
        for (pred, members), off in zip(schedule, col_off):
            s_prev = states[pred]
            width = len(members) * two_n
            # ONE wide MXU dot for all DAG nodes sharing this predecessor.
            ch = jnp.dot(s_prev.astype(jnp.bfloat16), ws_ref[:, off:off + width],
                         preferred_element_type=jnp.float32)
            for k, m in enumerate(members):
                base = k * two_n
                c = _sigmoid(ch[:, base:base + nhid_pad])
                hh = _act(genotype.recurrent[m][0],
                          ch[:, base + nhid_pad:base + two_n])
                s = s_prev + c * (hh - s_prev)
                node = m + 1
                if node in needed:                # drop dead states (vreg pressure)
                    states[node] = s
                if node in concat:
                    acc = s if acc is None else acc + s

        h = acc * inv_n                           # mean over concat states
        out_ref[t] = h.astype(out_ref.dtype)

    h_scr[...] = h                                # carry to next time chunk


# ---------------------------------------------------------------------------
# One DARTSCell layer over the whole sequence.
# ---------------------------------------------------------------------------
def darts_cell_layer(x, h0, W0, Ws, *, genotype, out_dtype=jnp.float32,
                     t_chunk_cap=16, batch_blocks=None):
    """x: (S, B, ninp), h0: (B, nhid), W0: (ninp+nhid, 2*nhid),
    Ws: (steps, nhid, 2*nhid).  Returns (outputs (S,B,nhid), final_h (B,nhid))."""
    S, B, ninp = x.shape
    nhid = h0.shape[-1]
    steps = Ws.shape[0]

    f32, bf16 = jnp.float32, jnp.bfloat16
    nhid_p = _round_up(nhid, 128)        # lane-dense hidden
    two_n = 2 * nhid_p
    B_p = _round_up(B, 8)                # sublane-aligned batch

    if batch_blocks is None:
        batch_blocks = _num_tensorcores()
    n_bb = batch_blocks if (batch_blocks > 1 and B_p % (8 * batch_blocks) == 0) else 1
    bb = B_p // n_bb

    vmem_limit = _vmem_limit_bytes()
    out_bytes = jnp.dtype(out_dtype).itemsize
    t_chunk = _pick_time_chunk(S, bb, nhid_p, steps, out_bytes, vmem_limit,
                               cap=t_chunk_cap)
    S_pad = _round_up(S, t_chunk)        # no divisor cliff: pad the tail

    schedule = _group_schedule(genotype)
    col_off, off = [], 0
    for _, members in schedule:
        col_off.append(off)
        off += len(members) * two_n
    col_off = tuple(col_off)

    # ---- one-time weight re-layout (plain XLA glue; in practice precomputed).
    # c|h halves kept fused at a 128-aligned lane boundary; per-step weights are
    # concatenated along N inside each shared-predecessor group.
    w0x = jnp.zeros((ninp, two_n), f32)
    w0x = w0x.at[:, :nhid].set(W0[:ninp, :nhid])
    w0x = w0x.at[:, nhid_p:nhid_p + nhid].set(W0[:ninp, nhid:])
    w0h = jnp.zeros((nhid_p, two_n), f32)
    w0h = w0h.at[:nhid, :nhid].set(W0[ninp:, :nhid])
    w0h = w0h.at[:nhid, nhid_p:nhid_p + nhid].set(W0[ninp:, nhid:])
    ws_fused = jnp.zeros((nhid_p, steps * two_n), f32)
    col = 0
    for _, members in schedule:
        for m in members:
            ws_fused = ws_fused.at[:nhid, col:col + nhid].set(Ws[m, :, :nhid])
            ws_fused = ws_fused.at[:nhid, col + nhid_p:col + nhid_p + nhid].set(
                Ws[m, :, nhid:])
            col += two_n
    w0x, w0h, ws_fused = w0x.astype(bf16), w0h.astype(bf16), ws_fused.astype(bf16)

    x_p = jnp.zeros((S_pad, B_p, ninp), bf16).at[:S, :B, :].set(x.astype(bf16))
    h0_p = jnp.zeros((B_p, nhid_p), f32).at[:B, :nhid].set(h0.astype(f32))

    # ---- (1) hoisted input projection: throughput matmul over all timesteps.
    rows = S_pad * B_p
    row_block = min(rows, 512)           # decoupled from t_chunk; fills the MXU
    rows_pad = _round_up(rows, row_block)
    x2d = x_p.reshape(rows, ninp)
    if rows_pad != rows:
        x2d = jnp.zeros((rows_pad, ninp), bf16).at[:rows].set(x2d)

    def run_xproj(single):
        return pl.pallas_call(
            _xproj_kernel,
            out_shape=jax.ShapeDtypeStruct((rows_pad, two_n), bf16),
            grid_spec=pltpu.PrefetchScalarGridSpec(
                num_scalar_prefetch=0,
                grid=(rows_pad // row_block,),
                in_specs=[
                    pl.BlockSpec((row_block, ninp), lambda i: (i, 0)),
                    _weight_spec((ninp, two_n), lambda i: (0, 0), single),
                ],
                out_specs=pl.BlockSpec((row_block, two_n), lambda i: (i, 0)),
            ),
            compiler_params=pltpu.CompilerParams(
                dimension_semantics=("parallel",),
                vmem_limit_bytes=vmem_limit),
        )(x2d, w0x)

    xproj = _call_with_weight_buffering(run_xproj)[:rows].reshape(S_pad, B_p, two_n)

    # ---- (2) serial recurrence: batch blocks ("parallel") x time chunks ("arbitrary").
    kernel = functools.partial(_darts_recurrent_kernel, genotype=genotype,
                               schedule=schedule, col_off=col_off,
                               nhid_pad=nhid_p, t_chunk=t_chunk)

    def run_recurrence(single):
        return pl.pallas_call(
            kernel,
            out_shape=jax.ShapeDtypeStruct((S_pad, B_p, nhid_p), out_dtype),
            grid_spec=pltpu.PrefetchScalarGridSpec(
                num_scalar_prefetch=0,
                grid=(n_bb, S_pad // t_chunk),
                in_specs=[
                    pl.BlockSpec((t_chunk, bb, two_n), lambda b, t: (t, b, 0)),   # xproj
                    pl.BlockSpec((bb, nhid_p), lambda b, t: (b, 0)),              # h0
                    _weight_spec((nhid_p, two_n), lambda b, t: (0, 0), single),   # W0 h-rows
                    _weight_spec((nhid_p, steps * two_n),
                                 lambda b, t: (0, 0), single),                    # Ws (grouped)
                ],
                out_specs=pl.BlockSpec((t_chunk, bb, nhid_p), lambda b, t: (t, b, 0)),
                scratch_shapes=[pltpu.VMEM((bb, nhid_p), f32)],                   # carried h
            ),
            compiler_params=pltpu.CompilerParams(
                dimension_semantics=("parallel", "arbitrary"),
                vmem_limit_bytes=vmem_limit),
        )(xproj, h0_p, w0h, ws_fused)

    out_p = _call_with_weight_buffering(run_recurrence)

    out = out_p[:S, :B, :nhid]
    hT = out_p[S - 1, :B, :nhid].astype(f32)   # final state == last timestep output
    return out, hT


def darts_forward(x, params, state=None, *, genotype=DARTS_GENOTYPE):
    """DARTS module forward.  x: (S, B, input_size).  Returns (output, state)."""
    S, B, _ = x.shape
    num_layers = len(params)
    nhid = params[0]["W0"].shape[1] // 2
    if state is None:
        state = jnp.zeros((num_layers, B, nhid), jnp.float32)
    new_states = []
    inputs = x
    for li in range(num_layers):
        last = li == num_layers - 1
        out, hT = darts_cell_layer(
            inputs, state[li], params[li]["W0"], params[li]["Ws"],
            genotype=genotype,
            # Inter-layer feed in bf16 (next layer casts to bf16 anyway);
            # final user-facing layer stays f32.
            out_dtype=jnp.float32 if last else jnp.bfloat16)
        # TODO(synk): inter-layer dropout (module default p=0 => identity).
        inputs = out
        new_states.append(hT)
    return inputs.astype(jnp.float32), jnp.stack(new_states)


# ---------------------------------------------------------------------------
# Deterministic parameter init (xavier_uniform, as in the module's __init__).
# ---------------------------------------------------------------------------
def init_params(key, input_size, hidden_size, num_layers, genotype):
    steps = len(genotype.recurrent)
    params = []
    for n in range(num_layers):
        ninp = input_size if n == 0 else hidden_size
        key, k0, k1 = jax.random.split(key, 3)
        b0 = (6.0 / ((ninp + hidden_size) + 2 * hidden_size)) ** 0.5
        W0 = jax.random.uniform(k0, (ninp + hidden_size, 2 * hidden_size),
                                jnp.float32, -b0, b0)
        bs = (6.0 / (hidden_size + 2 * hidden_size)) ** 0.5
        Ws = jax.random.uniform(k1, (steps, hidden_size, 2 * hidden_size),
                                jnp.float32, -bs, bs)
        params.append({"W0": W0, "Ws": Ws})
    return params


# ---------------------------------------------------------------------------
# Pure-JAX reference (mirrors the PyTorch forward) for correctness check.
# bf16_dots=True approximates the kernel's MXU numerics (bf16 operands, f32 acc).
# ---------------------------------------------------------------------------
def ref_forward(x, params, genotype, *, bf16_dots=False):
    def mm(a, b):
        if bf16_dots:
            return jnp.dot(a.astype(jnp.bfloat16), b.astype(jnp.bfloat16),
                           preferred_element_type=jnp.float32)
        return a @ b

    S, B, _ = x.shape
    H = params[0]["W0"].shape[1] // 2
    state = [jnp.zeros((B, H), jnp.float32) for _ in params]
    inputs = [x[t] for t in range(S)]
    for li, p in enumerate(params):
        layer_out = []
        for t in range(S):
            xt, h = inputs[t], state[li]
            ch = mm(jnp.concatenate([xt, h], axis=-1), p["W0"])
            c0 = jax.nn.sigmoid(ch[:, :H])
            h0 = jnp.tanh(ch[:, H:])
            s0 = h + c0 * (h0 - h)
            states = [s0]
            for i, (name, pred) in enumerate(genotype.recurrent):
                sp = states[pred]
                chi = mm(sp, p["Ws"][i])
                c = jax.nn.sigmoid(chi[:, :H])
                hh = _ACT[name](chi[:, H:])
                states.append(sp + c * (hh - sp))
            out = jnp.mean(jnp.stack([states[j] for j in genotype.concat], -1), -1)
            state[li] = out
            layer_out.append(out)
        inputs = layer_out
    return jnp.stack(layer_out), jnp.stack(state)


if __name__ == "__main__":
    key = jax.random.PRNGKey(0)
    seq_len, batch, input_size, hidden_size, num_layers = 8, 8, 32, 32, 1

    kx, kp = jax.random.split(key)
    x = jax.random.normal(kx, (seq_len, batch, input_size), jnp.float32)
    params = init_params(kp, input_size, hidden_size, num_layers, DARTS_GENOTYPE)

    out, state = darts_forward(x, params, genotype=DARTS_GENOTYPE)
    jax.block_until_ready((out, state))

    assert out.shape == (seq_len, batch, hidden_size)
    assert state.shape == (num_layers, batch, hidden_size)

    # Check vs. a reference using bf16-operand MXU numerics (kernel additionally
    # stores the x-projection in bf16 and uses the approx-reciprocal sigmoid).
    ref_out_b, ref_state_b = ref_forward(x, params, DARTS_GENOTYPE, bf16_dots=True)
    assert jnp.allclose(out, ref_out_b, atol=3e-2, rtol=3e-2)
    assert jnp.allclose(state, ref_state_b, atol=3e-2, rtol=3e-2)

    # Loose check vs. the exact f32 semantics of the PyTorch module.
    ref_out, ref_state = ref_forward(x, params, DARTS_GENOTYPE, bf16_dots=False)
    assert jnp.allclose(out, ref_out, atol=7e-2, rtol=7e-2)
    assert jnp.allclose(state, ref_state, atol=7e-2, rtol=7e-2)

    print("KERNEL_OK")
</pallas_src>

<mosaic_0001>
module attributes {stable_mosaic.version = 11 : i64} {
  func.func @_xproj_kernel(%arg0: i32, %arg1: memref<64x32xbf16, #tpu.memory_space<vmem>>, %arg2: memref<32x256xbf16, #tpu.memory_space<vmem>>, %arg3: memref<64x256xbf16, #tpu.memory_space<vmem>>) attributes {dimension_semantics = [#tpu.dimension_semantics<parallel>], iteration_bounds = array<i64: 1>, scalar_prefetch = 0 : i64, scratch_operands = 0 : i64, tpu.core_type = #tpu.core_type<tc>, window_params = [{transform_indices = @transform_0, window_bounds = array<i64: 64, 32>}, {pipeline_mode = #tpu.pipeline_mode<synchronous>, transform_indices = @transform_1, window_bounds = array<i64: 32, 256>}, {transform_indices = @transform_2, window_bounds = array<i64: 64, 256>}]} {
    %c0 = arith.constant 0 : index
    %c0_0 = arith.constant 0 : index
    %0 = vector.load %arg1[%c0, %c0_0] : memref<64x32xbf16, #tpu.memory_space<vmem>>, vector<64x32xbf16>
    %c0_1 = arith.constant 0 : index
    %c0_2 = arith.constant 0 : index
    %1 = vector.load %arg2[%c0_1, %c0_2] : memref<32x256xbf16, #tpu.memory_space<vmem>>, vector<32x256xbf16>
    %cst = arith.constant dense<0.000000e+00> : vector<64x256xf32>
    %2 = tpu.matmul %0, %1, %cst {dimension_numbers = #tpu.dot_dimension_numbers<[1], [0], [0], [1], [0, 0, 1, 1], [], []>} : vector<64x32xbf16>, vector<32x256xbf16>, vector<64x256xf32> -> vector<64x256xf32>
    %3 = arith.truncf %2 : vector<64x256xf32> to vector<64x256xbf16>
    %c0_3 = arith.constant 0 : index
    %c0_4 = arith.constant 0 : index
    %4 = vector.load %arg3[%c0_3, %c0_4] : memref<64x256xbf16, #tpu.memory_space<vmem>>, vector<64x256xbf16>
    tpu.vector_store %arg3[%c0_3, %c0_4], %3 {strides = array<i32>} : memref<64x256xbf16, #tpu.memory_space<vmem>>, vector<64x256xbf16>,
    return
  }
  func.func @transform_0(%arg0: i32) -> (i32, i32) {
    %c0_i32 = arith.constant 0 : i32
    %c0_i32_0 = arith.constant 0 : i32
    return %arg0, %c0_i32 : i32, i32
  }
  func.func @transform_1(%arg0: i32) -> (i32, i32) {
    %c0_i32 = arith.constant 0 : i32
    %c0_i32_0 = arith.constant 0 : i32
    %c0_i32_1 = arith.constant 0 : i32
    return %c0_i32, %c0_i32_0 : i32, i32
  }
  func.func @transform_2(%arg0: i32) -> (i32, i32) {
    %c0_i32 = arith.constant 0 : i32
    %c0_i32_0 = arith.constant 0 : i32
    return %arg0, %c0_i32 : i32, i32
  }
}

module attributes {stable_mosaic.version = 11 : i64} {
  func.func @_xproj_kernel(%arg0: i32, %arg1: memref<64x32xbf16, #tpu.memory_space<vmem>>, %arg2: memref<32x256xbf16, #tpu.memory_space<vmem>>, %arg3: memref<64x256xbf16, #tpu.memory_space<vmem>>) attributes {dimension_semantics = [#tpu.dimension_semantics<parallel>], iteration_bounds = array<i64: 1>, scalar_prefetch = 0 : i64, scratch_operands = 0 : i64, tpu.core_type = #tpu.core_type<tc>, window_params = [{transform_indices = @transform_0, window_bounds = array<i64: 64, 32>}, {pipeline_mode = #tpu.pipeline_mode<synchronous>, transform_indices = @transform_1, window_bounds = array<i64: 32, 256>}, {transform_indices = @transform_2, window_bounds = array<i64: 64, 256>}]} {
    %c0 = arith.constant 0 : index
    %c0_0 = arith.constant 0 : index
    %0 = vector.load %arg1[%c0, %c0_0] : memref<64x32xbf16, #tpu.memory_space<vmem>>, vector<64x32xbf16>
    %c0_1 = arith.constant 0 : index
    %c0_2 = arith.constant 0 : index
    %1 = vector.load %arg2[%c0_1, %c0_2] : memref<32x256xbf16, #tpu.memory_space<vmem>>, vector<32x256xbf16>
    %cst = arith.constant dense<0.000000e+00> : vector<64x256xf32>
    %2 = tpu.matmul %0, %1, %cst {dimension_numbers = #tpu.dot_dimension_numbers<[1], [0], [0], [1], [0, 0, 1, 1], [], []>} : vector<64x32xbf16>, vector<32x256xbf16>, vector<64x256xf32> -> vector<64x256xf32>
    %3 = arith.truncf %2 : vector<64x256xf32> to vector<64x256xbf16>
    %c0_3 = arith.constant 0 : index
    %c0_4 = arith.constant 0 : index
    %4 = vector.load %arg3[%c0_3, %c0_4] : memref<64x256xbf16, #tpu.memory_space<vmem>>, vector<64x256xbf16>
    tpu.vector_store %arg3[%c0_3, %c0_4], %3 {strides = array<i32>} : memref<64x256xbf16, #tpu.memory_space<vmem>>, vector<64x256xbf16>,
    return
  }
  func.func @transform_0(%arg0: i32) -> (i32, i32) {
    %c0_i32 = arith.constant 0 : i32
    %c0_i32_0 = arith.constant 0 : i32
    return %arg0, %c0_i32 : i32, i32
  }
  func.func @transform_1(%arg0: i32) -> (i32, i32) {
    %c0_i32 = arith.constant 0 : i32
    %c0_i32_0 = arith.constant 0 : i32
    %c0_i32_1 = arith.constant 0 : i32
    return %c0_i32, %c0_i32_0 : i32, i32
  }
  func.func @transform_2(%arg0: i32) -> (i32, i32) {
    %c0_i32 = arith.constant 0 : i32
    %c0_i32_0 = arith.constant 0 : i32
    return %arg0, %c0_i32 : i32, i32
  }
}

</mosaic_0001>

<llo_original>
// kernel: tpu_custom_call.1
$region0: #{tpu_custom_call.1}
  #allocation0 [shape = 'u32[]', space=smem, size = 0x4, offset = 0x4, fixed_abs, tag = 'smem constant byte address 0x4 - core index']
  #allocation1 [shape = 'u32[144,128]{1,0:T(1,128)}', space=vmem, size = 0x12000, scoped, tag = 'internal scratch']
  %s0 = inlined_call_operand.vmem [shape: bf16[64,32], index: 0, kind: input, shape index: {}]
  %s1 = inlined_call_operand.vmem [shape: bf16[32,256], index: 1, kind: input, shape index: {}]
  %s2 = inlined_call_operand.hbm [shape: bf16[64,256], index: 2, kind: output, shape index: {}]
  %s3 = sld [smem:[#allocation0]]
  $region18: #{tpu_custom_call.1} parent=0
    _
  %s5 = ssub.s32 1, %s3
  %s6 = scalar_select 0, %s5, %s3
  $region1: #{tpu_custom_call.1} parent=0
    #allocation2 [shape = 'u8[32768]{0}', space=vmem, size = 0x8000, scoped, tag = 'output window, operand 0, single buffered']
    #allocation3 [shape = 's32[1]{0}', space=sflag, size = 0x4, scoped, tag = 'scoped memory for tpu_custom_call.1']
    %7 = vsyncpa [#allocation3], 0
    // Predicated region
    $region2: #{tpu_custom_call.1} parent=1 // pred_check
      _
    $region3: #{tpu_custom_call.1} parent=1 // pred_check_branch
      %9 = sbr.rel (0) target = $region5
    $region4: #{tpu_custom_call.1} parent=1 // pred_region
      _
    $region5: #{tpu_custom_call.1} parent=1 // pred_fallthru
      _
    // Predicated region
    $region6: #{tpu_custom_call.1} parent=1 // pred_check
      _
    $region7: #{tpu_custom_call.1} parent=1 // pred_check_branch
      %11 = sbr.rel (0) target = $region9
    $region8: #{tpu_custom_call.1} parent=1 // pred_region
      _
    $region9: #{tpu_custom_call.1} parent=1 // pred_fallthru
      _
    %v13 = vld [vmem:[%s0] sm:$0xf]
    %v14 = vld [vmem:[%s0 + $0x4] sm:$0xf]
    %v15 = vld [vmem:[%s0 + $0x8] sm:$0xf]
    %v16 = vld [vmem:[%s0 + $0xc] sm:$0xf]
    %v17 = vld [vmem:[%s0 + $0x10] sm:$0xf]
    %v18 = vld [vmem:[%s0 + $0x14] sm:$0xf]
    %v19 = vld [vmem:[%s0 + $0x18] sm:$0xf]
    %v20 = vld [vmem:[%s0 + $0x1c] sm:$0xf]
    %v21 = vld [vmem:[%s1] sm:$0xff]
    %v22 = vld [vmem:[%s1 + $0x8] sm:$0xff]
    %v23 = vld [vmem:[%s1 + $0x10] sm:$0xff]
    %v24 = vld [vmem:[%s1 + $0x18] sm:$0xff]
    %v33 = vunpack.c.l.b16 %v13
    %v34 = vunpack.c.l.b16 %v14
    %v35 = vunpack.c.l.b16 %v15
    %v36 = vunpack.c.l.b16 %v16
    %v37 = vunpack.c.l.b16 %v17
    %v38 = vunpack.c.l.b16 %v18
    %v39 = vunpack.c.l.b16 %v19
    %v40 = vunpack.c.l.b16 %v20
    %v41 = vpack.c.b16 %v34, %v33
    %v42 = vpack.c.b16 %v36, %v35
    %v43 = vpack.c.b16 %v38, %v37
    %v44 = vpack.c.b16 %v40, %v39
    %v49 = vunpack.c.l.b16 %v21
    %v50 = vunpack.c.h.b16 %v21
    %v51 = vunpack.c.l.b16 %v22
    %v52 = vunpack.c.h.b16 %v22
    %v53 = vunpack.c.l.b16 %v23
    %v54 = vunpack.c.h.b16 %v23
    %v55 = vunpack.c.l.b16 %v24
    %v56 = vunpack.c.h.b16 %v24
    %v57 = vpack.c.b16 %v51, %v49
    %v58 = vpack.c.b16 %v52, %v50
    %v59 = vpack.c.b16 %v55, %v53
    %v60 = vpack.c.b16 %v56, %v54
    %vm65 = vcmask 261120
    %v67 = vsel %vm65, %v41, 0
    %v70 = vsel %vm65, %v42, 0
    %v73 = vsel %vm65, %v43, 0
    %v76 = vsel %vm65, %v44, 0
    %78 = vmatprep.subr.bf16.mxu0 0
    %79 = vmatpush1.bf16.msra.mxu0 0
    %80 = vmatprep.subr.bf16.mxu0 0
    %81 = vmatpush1.bf16.msra.mxu0 0
    %82 = vmatprep.subr.bf16.mxu0 0
    %83 = vmatpush1.bf16.msra.mxu0 0
    %84 = vmatprep.subr.bf16.mxu0 0
    %85 = vmatpush1.bf16.msra.mxu0 0
    %86 = vmatprep.subr.bf16.mxu0 0
    %87 = vmatpush1.bf16.msra.mxu0 0
    %88 = vmatprep.subr.bf16.mxu0 0
    %89 = vmatpush1.bf16.msra.mxu0 0
    %90 = vmatprep.subr.bf16.mxu0 %v60
    %91 = vmatpush1.bf16.msra.mxu0 %v59
    %92 = vmatprep.subr.bf16.mxu0 %v58
    %93 = vmatpush1.bf16.msra.mxu0 %v57
    %94 = vmatprep.subr.bf16.mxu0 0
    %95 = vmatpush2.bf16.msra.mxu0 0
    %96 = vmatprep.subr.bf16.mxu0 0
    %97 = vmatpush2.bf16.msra.mxu0 0
    %98 = vmatprep.subr.bf16.mxu0 0
    %99 = vmatpush2.bf16.msra.mxu0 0
    %100 = vmatprep.subr.bf16.mxu0 0
    %101 = vmatpush2.bf16.msra.mxu0 0
    %102 = vmatprep.subr.bf16.mxu0 0
    %103 = vmatpush2.bf16.msra.mxu0 0
    %104 = vmatprep.subr.bf16.mxu0 0
    %105 = vmatpush2.bf16.msra.mxu0 0
    %106 = vmatprep.subr.bf16.mxu0 0
    %107 = vmatpush2.bf16.msra.mxu0 0
    %108 = vmatprep.subr.bf16.mxu0 0
    %109 = vmatpush2.bf16.msra.mxu0 0
    %110 = vmatprep.mubr.bf16.mxu0 0
    %111 = vmatmul.mubr.bf16.gmra.mxu0 %v67
    %v112 = vpop.f32.mrf.mxu0
    %v113 = vadd.f32 0.0, %v112
    %v114 = vpop.f32.mrf.mxu0
    %v115 = vadd.f32 0.0, %v114
    %v116 = vpop.f32.mrf.mxu0
    %v117 = vadd.f32 0.0, %v116
    %v118 = vpop.f32.mrf.mxu0
    %v119 = vadd.f32 0.0, %v118
    %120 = vmatprep.mubr.bf16.mxu0 0
    %121 = vmatmul.mubr.bf16.gmra.mxu0 %v70
    %v122 = vpop.f32.mrf.mxu0
    %v123 = vadd.f32 0.0, %v122
    %v124 = vpop.f32.mrf.mxu0
    %v125 = vadd.f32 0.0, %v124
    %v126 = vpop.f32.mrf.mxu0
    %v127 = vadd.f32 0.0, %v126
    %v128 = vpop.f32.mrf.mxu0
    %v129 = vadd.f32 0.0, %v128
    %130 = vmatprep.mubr.bf16.mxu0 0
    %131 = vmatmul.mubr.bf16.gmra.mxu0 %v73
    %v132 = vpop.f32.mrf.mxu0
    %v133 = vadd.f32 0.0, %v132
    %v134 = vpop.f32.mrf.mxu0
    %v135 = vadd.f32 0.0, %v134
    %v136 = vpop.f32.mrf.mxu0
    %v137 = vadd.f32 0.0, %v136
    %v138 = vpop.f32.mrf.mxu0
    %v139 = vadd.f32 0.0, %v138
    %140 = vmatprep.mubr.bf16.mxu0 0
    %141 = vmatmul.mubr.bf16.gmra.mxu0 %v76
    %v142 = vpop.f32.mrf.mxu0
    %v143 = vadd.f32 0.0, %v142
    %v144 = vpop.f32.mrf.mxu0
    %v145 = vadd.f32 0.0, %v144
    %v146 = vpop.f32.mrf.mxu0
    %v147 = vadd.f32 0.0, %v146
    %v148 = vpop.f32.mrf.mxu0
    %v149 = vadd.f32 0.0, %v148
    %150 = vdwg.mxu0
    %v151 = vpack.c.bf16 %v117, %v113
    %v152 = vpack.c.bf16 %v119, %v115
    %v153 = vpack.c.bf16 %v127, %v123
    %v154 = vpack.c.bf16 %v129, %v125
    %v155 = vpack.c.bf16 %v137, %v133
    %v156 = vpack.c.bf16 %v139, %v135
    %v157 = vpack.c.bf16 %v147, %v143
    %v158 = vpack.c.bf16 %v149, %v145
    %v167 = vunpack.c.l.b16 %v151
    %v168 = vunpack.c.l.b16 %v152
    %v169 = vunpack.c.h.b16 %v151
    %v170 = vunpack.c.h.b16 %v152
    %v171 = vunpack.c.l.b16 %v153
    %v172 = vunpack.c.l.b16 %v154
    %v173 = vunpack.c.h.b16 %v153
    %v174 = vunpack.c.h.b16 %v154
    %v175 = vunpack.c.l.b16 %v155
    %v176 = vunpack.c.l.b16 %v156
    %v177 = vunpack.c.h.b16 %v155
    %v178 = vunpack.c.h.b16 %v156
    %v179 = vunpack.c.l.b16 %v157
    %v180 = vunpack.c.l.b16 %v158
    %v181 = vunpack.c.h.b16 %v157
    %v182 = vunpack.c.h.b16 %v158
    %v183 = vpack.c.b16 %v168, %v167
    %v184 = vpack.c.b16 %v170, %v169
    %v185 = vpack.c.b16 %v172, %v171
    %v186 = vpack.c.b16 %v174, %v173
    %v187 = vpack.c.b16 %v176, %v175
    %v188 = vpack.c.b16 %v178, %v177
    %v189 = vpack.c.b16 %v180, %v179
    %v190 = vpack.c.b16 %v182, %v181
    %199 = vst [vmem:[#allocation2] sm:$0xff] %v183
    %200 = vst [vmem:[#allocation2 + $0x8] sm:$0xff] %v184
    %201 = vst [vmem:[#allocation2 + $0x10] sm:$0xff] %v185
    %202 = vst [vmem:[#allocation2 + $0x18] sm:$0xff] %v186
    %203 = vst [vmem:[#allocation2 + $0x20] sm:$0xff] %v187
    %204 = vst [vmem:[#allocation2 + $0x28] sm:$0xff] %v188
    %205 = vst [vmem:[#allocation2 + $0x30] sm:$0xff] %v189
    %206 = vst [vmem:[#allocation2 + $0x38] sm:$0xff] %v190
    // Predicated region
    $region10: #{tpu_custom_call.1} parent=1 // pred_check
      _
    $region11: #{tpu_custom_call.1} parent=1 // pred_check_branch
      %208 = sbr.rel (0) target = $region13
    $region12: #{tpu_custom_call.1} parent=1 // pred_region
      %s210 = ssub.s32 1024, 1024
      %211 = vsyncadd [#allocation3], %s210
      %s212 = sshll.u32 [#allocation2], 4
      %s213 = int_to_ptr.vmem [resolvable:$true] %s212
      %218 = dma.vmem_to_hbm [thread:$0]  %s213, 1024, %s2, [#allocation3], 128, 128, 8
    $region13: #{tpu_custom_call.1} parent=1 // pred_fallthru
      _
    // Predicated region
    $region14: #{tpu_custom_call.1} parent=1 // pred_check
      _
    $region15: #{tpu_custom_call.1} parent=1 // pred_check_branch
      %220 = sbr.rel (0) target = $region17
    $region16: #{tpu_custom_call.1} parent=1 // pred_region
      %221 = dma.done [#allocation3], 1024
    $region17: #{tpu_custom_call.1} parent=1 // pred_fallthru
      _
    %222 = vsyncpa [#allocation3], 1

// kernel: tpu_custom_call.1
$region0: #{tpu_custom_call.1}
  #allocation0 [shape = 'u32[]', space=smem, size = 0x4, offset = 0x4, fixed_abs, tag = 'smem constant byte address 0x4 - core index']
  #allocation1 [shape = 'u32[144,128]{1,0:T(1,128)}', space=vmem, size = 0x12000, scoped, tag = 'internal scratch']
  %s0 = inlined_call_operand.vmem [shape: bf16[64,32], index: 0, kind: input, shape index: {}]
  %s1 = inlined_call_operand.vmem [shape: bf16[32,256], index: 1, kind: input, shape index: {}]
  %s2 = inlined_call_operand.hbm [shape: bf16[64,256], index: 2, kind: output, shape index: {}]
  %s3 = sld [smem:[#allocation0]]
  $region18: #{tpu_custom_call.1} parent=0
    _
  %s5 = ssub.s32 1, %s3
  %s6 = scalar_select 0, %s5, %s3
  $region1: #{tpu_custom_call.1} parent=0
    #allocation2 [shape = 'u8[32768]{0}', space=vmem, size = 0x8000, scoped, tag = 'output window, operand 0, single buffered']
    #allocation3 [shape = 's32[1]{0}', space=sflag, size = 0x4, scoped, tag = 'scoped memory for tpu_custom_call.1']
    %7 = vsyncpa [#allocation3], 0
    // Predicated region
    $region2: #{tpu_custom_call.1} parent=1 // pred_check
      _
    $region3: #{tpu_custom_call.1} parent=1 // pred_check_branch
      %9 = sbr.rel (0) target = $region5
    $region4: #{tpu_custom_call.1} parent=1 // pred_region
      _
    $region5: #{tpu_custom_call.1} parent=1 // pred_fallthru
      _
    // Predicated region
    $region6: #{tpu_custom_call.1} parent=1 // pred_check
      _
    $region7: #{tpu_custom_call.1} parent=1 // pred_check_branch
      %11 = sbr.rel (0) target = $region9
    $region8: #{tpu_custom_call.1} parent=1 // pred_region
      _
    $region9: #{tpu_custom_call.1} parent=1 // pred_fallthru
      _
    %v13 = vld [vmem:[%s0] sm:$0xf]
    %v14 = vld [vmem:[%s0 + $0x4] sm:$0xf]
    %v15 = vld [vmem:[%s0 + $0x8] sm:$0xf]
    %v16 = vld [vmem:[%s0 + $0xc] sm:$0xf]
    %v17 = vld [vmem:[%s0 + $0x10] sm:$0xf]
    %v18 = vld [vmem:[%s0 + $0x14] sm:$0xf]
    %v19 = vld [vmem:[%s0 + $0x18] sm:$0xf]
    %v20 = vld [vmem:[%s0 + $0x1c] sm:$0xf]
    %v21 = vld [vmem:[%s1] sm:$0xff]
    %v22 = vld [vmem:[%s1 + $0x8] sm:$0xff]
    %v23 = vld [vmem:[%s1 + $0x10] sm:$0xff]
    %v24 = vld [vmem:[%s1 + $0x18] sm:$0xff]
    %v33 = vunpack.c.l.b16 %v13
    %v34 = vunpack.c.l.b16 %v14
    %v35 = vunpack.c.l.b16 %v15
    %v36 = vunpack.c.l.b16 %v16
    %v37 = vunpack.c.l.b16 %v17
    %v38 = vunpack.c.l.b16 %v18
    %v39 = vunpack.c.l.b16 %v19
    %v40 = vunpack.c.l.b16 %v20
    %v41 = vpack.c.b16 %v34, %v33
    %v42 = vpack.c.b16 %v36, %v35
    %v43 = vpack.c.b16 %v38, %v37
    %v44 = vpack.c.b16 %v40, %v39
    %v49 = vunpack.c.l.b16 %v21
    %v50 = vunpack.c.h.b16 %v21
    %v51 = vunpack.c.l.b16 %v22
    %v52 = vunpack.c.h.b16 %v22
    %v53 = vunpack.c.l.b16 %v23
    %v54 = vunpack.c.h.b16 %v23
    %v55 = vunpack.c.l.b16 %v24
    %v56 = vunpack.c.h.b16 %v24
    %v57 = vpack.c.b16 %v51, %v49
    %v58 = vpack.c.b16 %v52, %v50
    %v59 = vpack.c.b16 %v55, %v53
    %v60 = vpack.c.b16 %v56, %v54
    %vm65 = vcmask 261120
    %v67 = vsel %vm65, %v41, 0
    %v70 = vsel %vm65, %v42, 0
    %v73 = vsel %vm65, %v43, 0
    %v76 = vsel %vm65, %v44, 0
    %78 = vmatprep.subr.bf16.mxu0 0
    %79 = vmatpush1.bf16.msra.mxu0 0
    %80 = vmatprep.subr.bf16.mxu0 0
    %81 = vmatpush1.bf16.msra.mxu0 0
    %82 = vmatprep.subr.bf16.mxu0 0
    %83 = vmatpush1.bf16.msra.mxu0 0
    %84 = vmatprep.subr.bf16.mxu0 0
    %85 = vmatpush1.bf16.msra.mxu0 0
    %86 = vmatprep.subr.bf16.mxu0 0
    %87 = vmatpush1.bf16.msra.mxu0 0
    %88 = vmatprep.subr.bf16.mxu0 0
    %89 = vmatpush1.bf16.msra.mxu0 0
    %90 = vmatprep.subr.bf16.mxu0 %v60
    %91 = vmatpush1.bf16.msra.mxu0 %v59
    %92 = vmatprep.subr.bf16.mxu0 %v58
    %93 = vmatpush1.bf16.msra.mxu0 %v57
    %94 = vmatprep.subr.bf16.mxu0 0
    %95 = vmatpush2.bf16.msra.mxu0 0
    %96 = vmatprep.subr.bf16.mxu0 0
    %97 = vmatpush2.bf16.msra.mxu0 0
    %98 = vmatprep.subr.bf16.mxu0 0
    %99 = vmatpush2.bf16.msra.mxu0 0
    %100 = vmatprep.subr.bf16.mxu0 0
    %101 = vmatpush2.bf16.msra.mxu0 0
    %102 = vmatprep.subr.bf16.mxu0 0
    %103 = vmatpush2.bf16.msra.mxu0 0
    %104 = vmatprep.subr.bf16.mxu0 0
    %105 = vmatpush2.bf16.msra.mxu0 0
    %106 = vmatprep.subr.bf16.mxu0 0
    %107 = vmatpush2.bf16.msra.mxu0 0
    %108 = vmatprep.subr.bf16.mxu0 0
    %109 = vmatpush2.bf16.msra.mxu0 0
    %110 = vmatprep.mubr.bf16.mxu0 0
    %111 = vmatmul.mubr.bf16.gmra.mxu0 %v67
    %v112 = vpop.f32.mrf.mxu0
    %v113 = vadd.f32 0.0, %v112
    %v114 = vpop.f32.mrf.mxu0
    %v115 = vadd.f32 0.0, %v114
    %v116 = vpop.f32.mrf.mxu0
    %v117 = vadd.f32 0.0, %v116
    %v118 = vpop.f32.mrf.mxu0
    %v119 = vadd.f32 0.0, %v118
    %120 = vmatprep.mubr.bf16.mxu0 0
    %121 = vmatmul.mubr.bf16.gmra.mxu0 %v70
    %v122 = vpop.f32.mrf.mxu0
    %v123 = vadd.f32 0.0, %v122
    %v124 = vpop.f32.mrf.mxu0
    %v125 = vadd.f32 0.0, %v124
    %v126 = vpop.f32.mrf.mxu0
    %v127 = vadd.f32 0.0, %v126
    %v128 = vpop.f32.mrf.mxu0
    %v129 = vadd.f32 0.0, %v128
    %130 = vmatprep.mubr.bf16.mxu0 0
    %131 = vmatmul.mubr.bf16.gmra.mxu0 %v73
    %v132 = vpop.f32.mrf.mxu0
    %v133 = vadd.f32 0.0, %v132
    %v134 = vpop.f32.mrf.mxu0
    %v135 = vadd.f32 0.0, %v134
    %v136 = vpop.f32.mrf.mxu0
    %v137 = vadd.f32 0.0, %v136
    %v138 = vpop.f32.mrf.mxu0
    %v139 = vadd.f32 0.0, %v138
    %140 = vmatprep.mubr.bf16.mxu0 0
    %141 = vmatmul.mubr.bf16.gmra.mxu0 %v76
    %v142 = vpop.f32.mrf.mxu0
    %v143 = vadd.f32 0.0, %v142
    %v144 = vpop.f32.mrf.mxu0
    %v145 = vadd.f32 0.0, %v144
    %v146 = vpop.f32.mrf.mxu0
    %v147 = vadd.f32 0.0, %v146
    %v148 = vpop.f32.mrf.mxu0
    %v149 = vadd.f32 0.0, %v148
    %150 = vdwg.mxu0
    %v151 = vpack.c.bf16 %v117, %v113
    %v152 = vpack.c.bf16 %v119, %v115
    %v153 = vpack.c.bf16 %v127, %v123
    %v154 = vpack.c.bf16 %v129, %v125
    %v155 = vpack.c.bf16 %v137, %v133
    %v156 = vpack.c.bf16 %v139, %v135
    %v157 = vpack.c.bf16 %v147, %v143
    %v158 = vpack.c.bf16 %v149, %v145
    %v167 = vunpack.c.l.b16 %v151
    %v168 = vunpack.c.l.b16 %v152
    %v169 = vunpack.c.h.b16 %v151
    %v170 = vunpack.c.h.b16 %v152
    %v171 = vunpack.c.l.b16 %v153
    %v172 = vunpack.c.l.b16 %v154
    %v173 = vunpack.c.h.b16 %v153
    %v174 = vunpack.c.h.b16 %v154
    %v175 = vunpack.c.l.b16 %v155
    %v176 = vunpack.c.l.b16 %v156
    %v177 = vunpack.c.h.b16 %v155
    %v178 = vunpack.c.h.b16 %v156
    %v179 = vunpack.c.l.b16 %v157
    %v180 = vunpack.c.l.b16 %v158
    %v181 = vunpack.c.h.b16 %v157
    %v182 = vunpack.c.h.b16 %v158
    %v183 = vpack.c.b16 %v168, %v167
    %v184 = vpack.c.b16 %v170, %v169
    %v185 = vpack.c.b16 %v172, %v171
    %v186 = vpack.c.b16 %v174, %v173
    %v187 = vpack.c.b16 %v176, %v175
    %v188 = vpack.c.b16 %v178, %v177
    %v189 = vpack.c.b16 %v180, %v179
    %v190 = vpack.c.b16 %v182, %v181
    %199 = vst [vmem:[#allocation2] sm:$0xff] %v183
    %200 = vst [vmem:[#allocation2 + $0x8] sm:$0xff] %v184
    %201 = vst [vmem:[#allocation2 + $0x10] sm:$0xff] %v185
    %202 = vst [vmem:[#allocation2 + $0x18] sm:$0xff] %v186
    %203 = vst [vmem:[#allocation2 + $0x20] sm:$0xff] %v187
    %204 = vst [vmem:[#allocation2 + $0x28] sm:$0xff] %v188
    %205 = vst [vmem:[#allocation2 + $0x30] sm:$0xff] %v189
    %206 = vst [vmem:[#allocation2 + $0x38] sm:$0xff] %v190
    // Predicated region
    $region10: #{tpu_custom_call.1} parent=1 // pred_check
      _
    $region11: #{tpu_custom_call.1} parent=1 // pred_check_branch
      %208 = sbr.rel (0) target = $region13
    $region12: #{tpu_custom_call.1} parent=1 // pred_region
      %s210 = ssub.s32 1024, 1024
      %211 = vsyncadd [#allocation3], %s210
      %s212 = sshll.u32 [#allocation2], 4
      %s213 = int_to_ptr.vmem [resolvable:$true] %s212
      %218 = dma.vmem_to_hbm [thread:$0]  %s213, 1024, %s2, [#allocation3], 128, 128, 8
    $region13: #{tpu_custom_call.1} parent=1 // pred_fallthru
      _
    // Predicated region
    $region14: #{tpu_custom_call.1} parent=1 // pred_check
      _
    $region15: #{tpu_custom_call.1} parent=1 // pred_check_branch
      %220 = sbr.rel (0) target = $region17
    $region16: #{tpu_custom_call.1} parent=1 // pred_region
      %221 = dma.done [#allocation3], 1024
    $region17: #{tpu_custom_call.1} parent=1 // pred_fallthru
      _
    %222 = vsyncpa [#allocation3], 1

</llo_original>
